<compile_context>
chip_gen: v6e
topology: v6e:2x2x1
jax: 0.10.0
libtpu: 0.0.40
codegen_flags: <defaults>
</compile_context>

<pallas_src>
import jax
import jax.numpy as jnp
from jax.experimental import pallas as pl
from jax.experimental.pallas import tpu as pltpu


def _round_up(n, m):
    return ((n + m - 1) // m) * m


def fake_news_mlp_kernel(xt_ref, w1_ref, b1_ref, w2_ref, b2_ref,
                         w3_ref, b3_ref, o_ref):
    # xt: (in_dim, TB) — batch on lanes, features on sublanes.
    xt = xt_ref[...]

    # hidden1 + ReLU : (32, TB)
    h1 = jnp.dot(w1_ref[...], xt, preferred_element_type=jnp.float32) + b1_ref[...]
    h1 = jnp.maximum(h1, 0.0)

    # hidden2 + ReLU : (16, TB)
    h2 = jnp.dot(w2_ref[...], h1, preferred_element_type=jnp.float32) + b2_ref[...]
    h2 = jnp.maximum(h2, 0.0)

    # output layer : (out_dim, TB)
    logits = jnp.dot(w3_ref[...], h2, preferred_element_type=jnp.float32) + b3_ref[...]

    out_dim = o_ref.shape[0]
    if out_dim == 2:
        # softmax over 2 classes == sigmoid of the logit difference.
        # Avoids the cross-sublane (XLU) reduce; exp goes to the EUP slot.
        p0 = 1.0 / (1.0 + jnp.exp(logits[1:2, :] - logits[0:1, :]))
        probs = jnp.concatenate([p0, 1.0 - p0], axis=0)
    else:
        # General numerically-stable softmax over the class (sublane) axis.
        m = jnp.max(logits, axis=0, keepdims=True)
        e = jnp.exp(logits - m)
        probs = e * pl.reciprocal(jnp.sum(e, axis=0, keepdims=True), approx=False)

    o_ref[...] = probs.astype(o_ref.dtype)


def fake_news_forward(x, params, *, max_block_b=1024):
    """x: (B, in_dim) float32 (PyTorch layout). Returns (B, out_dim) probs."""
    w1, b1, w2, b2, w3, b3 = (params["w1"], params["b1"], params["w2"],
                              params["b2"], params["w3"], params["b3"])
    B, in_dim = x.shape
    h1_dim, h2_dim, out_dim = w1.shape[0], w2.shape[0], w3.shape[0]

    # Batch tile: multiple of 128 lanes.  Keep a single grid step whenever the
    # batch fits in max_block_b columns (per-step overhead ~0.35us dominates
    # this tiny MLP); otherwise stream max_block_b-wide tiles.
    B128 = _round_up(B, 128)
    TB = B128 if B128 <= max_block_b else max_block_b
    B_pad = _round_up(B, TB)

    # Lane-dense layout: (in_dim, B_pad); zero-pad the batch tail (padded
    # columns produce finite outputs that are sliced away below).
    xt = jnp.pad(x.T, ((0, 0), (0, B_pad - B)))

    # Weights/biases stay VMEM-resident: constant block index across the grid.
    resident = lambda shape: pl.BlockSpec(shape, lambda i: (0, 0))

    cost = pl.CostEstimate(
        flops=2 * B_pad * (in_dim * h1_dim + h1_dim * h2_dim + h2_dim * out_dim),
        transcendentals=B_pad * max(out_dim - 1, 1),
        bytes_accessed=4 * (xt.size + out_dim * B_pad + w1.size + b1.size
                            + w2.size + b2.size + w3.size + b3.size),
    )

    out_t = pl.pallas_call(
        fake_news_mlp_kernel,
        out_shape=jax.ShapeDtypeStruct((out_dim, B_pad), jnp.float32),
        grid=(B_pad // TB,),
        in_specs=[
            pl.BlockSpec((in_dim, TB), lambda i: (0, i)),   # streamed x tile
            resident(w1.shape), resident(b1.shape),
            resident(w2.shape), resident(b2.shape),
            resident(w3.shape), resident(b3.shape),
        ],
        out_specs=pl.BlockSpec((out_dim, TB), lambda i: (0, i)),
        compiler_params=pltpu.CompilerParams(
            dimension_semantics=("parallel",)),             # megacore-friendly
        cost_estimate=cost,
    )(xt, w1, b1, w2, b2, w3, b3)

    # Back to PyTorch (B, out_dim) layout, dropping batch padding.
    return out_t[:, :B].T


def init_params(key, in_dim, out_dim=2):
    """Deterministic init mimicking nn.Linear's uniform(-1/sqrt(fan_in), +).

    Weights stored in PyTorch layout (out_features, in_features); biases as
    (out_features, 1) column vectors for the lane-dense kernel.
    """
    ks = jax.random.split(key, 6)

    def linear(kw, kb, fan_in, fan_out):
        bound = 1.0 / jnp.sqrt(jnp.float32(fan_in))
        w = jax.random.uniform(kw, (fan_out, fan_in), jnp.float32, -bound, bound)
        b = jax.random.uniform(kb, (fan_out, 1), jnp.float32, -bound, bound)
        return w, b

    w1, b1 = linear(ks[0], ks[1], in_dim, 32)
    w2, b2 = linear(ks[2], ks[3], 32, 16)
    w3, b3 = linear(ks[4], ks[5], 16, out_dim)
    return {"w1": w1, "b1": b1, "w2": w2, "b2": b2, "w3": w3, "b3": b3}


def reference_forward(x, p):
    h1 = jnp.maximum(x @ p["w1"].T + p["b1"].T, 0.0)
    h2 = jnp.maximum(h1 @ p["w2"].T + p["b2"].T, 0.0)
    logits = h2 @ p["w3"].T + p["b3"].T
    return jax.nn.softmax(logits, axis=1)


# TODO(synk): load_weights (torch checkpoint I/O) and dict_to_tensor (host-side
# python-dict feature extraction) are host utilities with no kernel equivalent.

if __name__ == "__main__":
    key = jax.random.PRNGKey(0)
    k_param, k_x1, k_x2 = jax.random.split(key, 3)

    # in_dim=7 matches dict_to_tensor's 7 handcrafted features; out_dim=2.
    in_dim, out_dim = 7, 2
    params = init_params(k_param, in_dim, out_dim)

    # Small inference-style batch (single grid step, padded to 128 lanes).
    x_small = jax.random.normal(k_x1, (8, in_dim), jnp.float32)
    out_small = jax.block_until_ready(fake_news_forward(x_small, params))
    ref_small = reference_forward(x_small, params)
    assert out_small.shape == (8, out_dim)
    assert jnp.allclose(out_small, ref_small, atol=1e-5, rtol=1e-5)
    assert jnp.allclose(jnp.sum(out_small, axis=1), jnp.ones((8,)), atol=1e-5)

    # Larger batch exercising the padded / multi-tile path.
    x_big = jax.random.normal(k_x2, (640, in_dim), jnp.float32)
    out_big = jax.block_until_ready(fake_news_forward(x_big, params))
    ref_big = reference_forward(x_big, params)
    assert out_big.shape == (640, out_dim)
    assert jnp.allclose(out_big, ref_big, atol=1e-5, rtol=1e-5)
    assert jnp.allclose(jnp.sum(out_big, axis=1), jnp.ones((640,)), atol=1e-5)

    # Batch larger than one tile (streams multiple grid steps).
    x_huge = jax.random.normal(k_x2, (2304, in_dim), jnp.float32)
    out_huge = jax.block_until_ready(fake_news_forward(x_huge, params))
    ref_huge = reference_forward(x_huge, params)
    assert out_huge.shape == (2304, out_dim)
    assert jnp.allclose(out_huge, ref_huge, atol=1e-5, rtol=1e-5)

    print("KERNEL_OK")
</pallas_src>

<mosaic_0001>
module attributes {stable_mosaic.version = 11 : i64} {
  func.func @fake_news_mlp_kernel(%arg0: i32, %arg1: memref<7x128xf32, #tpu.memory_space<vmem>>, %arg2: memref<32x7xf32, #tpu.memory_space<vmem>>, %arg3: memref<32x1xf32, #tpu.memory_space<vmem>>, %arg4: memref<16x32xf32, #tpu.memory_space<vmem>>, %arg5: memref<16x1xf32, #tpu.memory_space<vmem>>, %arg6: memref<2x16xf32, #tpu.memory_space<vmem>>, %arg7: memref<2x1xf32, #tpu.memory_space<vmem>>, %arg8: memref<2x128xf32, #tpu.memory_space<vmem>>) attributes {dimension_semantics = [#tpu.dimension_semantics<parallel>], iteration_bounds = array<i64: 1>, scalar_prefetch = 0 : i64, scratch_operands = 0 : i64, tpu.core_type = #tpu.core_type<tc>, window_params = [{transform_indices = @transform_0, window_bounds = array<i64: 7, 128>}, {pipeline_mode = #tpu.pipeline_mode<synchronous>, transform_indices = @transform_1, window_bounds = array<i64: 32, 7>}, {pipeline_mode = #tpu.pipeline_mode<synchronous>, transform_indices = @transform_2, window_bounds = array<i64: 32, 1>}, {pipeline_mode = #tpu.pipeline_mode<synchronous>, transform_indices = @transform_3, window_bounds = array<i64: 16, 32>}, {pipeline_mode = #tpu.pipeline_mode<synchronous>, transform_indices = @transform_4, window_bounds = array<i64: 16, 1>}, {pipeline_mode = #tpu.pipeline_mode<synchronous>, transform_indices = @transform_5, window_bounds = array<i64: 2, 16>}, {pipeline_mode = #tpu.pipeline_mode<synchronous>, transform_indices = @transform_6, window_bounds = array<i64: 2, 1>}, {transform_indices = @transform_7, window_bounds = array<i64: 2, 128>}]} {
    %c0 = arith.constant 0 : index
    %c0_0 = arith.constant 0 : index
    %0 = vector.load %arg1[%c0, %c0_0] : memref<7x128xf32, #tpu.memory_space<vmem>>, vector<7x128xf32>
    %c0_1 = arith.constant 0 : index
    %c0_2 = arith.constant 0 : index
    %1 = vector.load %arg2[%c0_1, %c0_2] : memref<32x7xf32, #tpu.memory_space<vmem>>, vector<32x7xf32>
    %cst = arith.constant dense<0.000000e+00> : vector<32x128xf32>
    %2 = tpu.matmul %1, %0, %cst {dimension_numbers = #tpu.dot_dimension_numbers<[1], [0], [0], [1], [0, 0, 1, 1], [], []>} : vector<32x7xf32>, vector<7x128xf32>, vector<32x128xf32> -> vector<32x128xf32>
    %c0_3 = arith.constant 0 : index
    %c0_4 = arith.constant 0 : index
    %3 = vector.load %arg3[%c0_3, %c0_4] : memref<32x1xf32, #tpu.memory_space<vmem>>, vector<32x1xf32>
    %4 = vector.broadcast %3 : vector<32x1xf32> to vector<32x128xf32>
    %5 = arith.addf %2, %4 : vector<32x128xf32>
    %cst_5 = arith.constant 0.000000e+00 : f32
    %6 = vector.broadcast %cst_5 : f32 to vector<32x128xf32>
    %7 = arith.maximumf %5, %6 : vector<32x128xf32>
    %c0_6 = arith.constant 0 : index
    %c0_7 = arith.constant 0 : index
    %8 = vector.load %arg4[%c0_6, %c0_7] : memref<16x32xf32, #tpu.memory_space<vmem>>, vector<16x32xf32>
    %cst_8 = arith.constant dense<0.000000e+00> : vector<16x128xf32>
    %9 = tpu.matmul %8, %7, %cst_8 {dimension_numbers = #tpu.dot_dimension_numbers<[1], [0], [0], [1], [0, 0, 1, 1], [], []>} : vector<16x32xf32>, vector<32x128xf32>, vector<16x128xf32> -> vector<16x128xf32>
    %c0_9 = arith.constant 0 : index
    %c0_10 = arith.constant 0 : index
    %10 = vector.load %arg5[%c0_9, %c0_10] : memref<16x1xf32, #tpu.memory_space<vmem>>, vector<16x1xf32>
    %11 = vector.broadcast %10 : vector<16x1xf32> to vector<16x128xf32>
    %12 = arith.addf %9, %11 : vector<16x128xf32>
    %cst_11 = arith.constant 0.000000e+00 : f32
    %13 = vector.broadcast %cst_11 : f32 to vector<16x128xf32>
    %14 = arith.maximumf %12, %13 : vector<16x128xf32>
    %c0_12 = arith.constant 0 : index
    %c0_13 = arith.constant 0 : index
    %15 = vector.load %arg6[%c0_12, %c0_13] : memref<2x16xf32, #tpu.memory_space<vmem>>, vector<2x16xf32>
    %cst_14 = arith.constant dense<0.000000e+00> : vector<2x128xf32>
    %16 = tpu.matmul %15, %14, %cst_14 {dimension_numbers = #tpu.dot_dimension_numbers<[1], [0], [0], [1], [0, 0, 1, 1], [], []>} : vector<2x16xf32>, vector<16x128xf32>, vector<2x128xf32> -> vector<2x128xf32>
    %c0_15 = arith.constant 0 : index
    %c0_16 = arith.constant 0 : index
    %17 = vector.load %arg7[%c0_15, %c0_16] : memref<2x1xf32, #tpu.memory_space<vmem>>, vector<2x1xf32>
    %18 = vector.broadcast %17 : vector<2x1xf32> to vector<2x128xf32>
    %19 = arith.addf %16, %18 : vector<2x128xf32>
    %20 = vector.extract_strided_slice %19 {offsets = [1, 0], sizes = [1, 128], strides = [1, 1]} : vector<2x128xf32> to vector<1x128xf32>
    %21 = vector.extract_strided_slice %19 {offsets = [0, 0], sizes = [1, 128], strides = [1, 1]} : vector<2x128xf32> to vector<1x128xf32>
    %22 = arith.subf %20, %21 : vector<1x128xf32>
    %23 = math.exp %22 : vector<1x128xf32>
    %cst_17 = arith.constant 1.000000e+00 : f32
    %24 = vector.broadcast %cst_17 : f32 to vector<1x128xf32>
    %25 = arith.addf %24, %23 : vector<1x128xf32>
    %cst_18 = arith.constant 1.000000e+00 : f32
    %26 = vector.broadcast %cst_18 : f32 to vector<1x128xf32>
    %27 = arith.divf %26, %25 : vector<1x128xf32>
    %cst_19 = arith.constant 1.000000e+00 : f32
    %28 = vector.broadcast %cst_19 : f32 to vector<1x128xf32>
    %29 = arith.subf %28, %27 : vector<1x128xf32>
    %30 = tpu.concatenate %27, %29 in 0 : vector<1x128xf32>, vector<1x128xf32> -> vector<2x128xf32>
    %c0_20 = arith.constant 0 : index
    %c0_21 = arith.constant 0 : index
    %31 = vector.load %arg8[%c0_20, %c0_21] : memref<2x128xf32, #tpu.memory_space<vmem>>, vector<2x128xf32>
    tpu.vector_store %arg8[%c0_20, %c0_21], %30 {strides = array<i32>} : memref<2x128xf32, #tpu.memory_space<vmem>>, vector<2x128xf32>,
    return
  }
  func.func @transform_0(%arg0: i32) -> (i32, i32) {
    %c0_i32 = arith.constant 0 : i32
    %c0_i32_0 = arith.constant 0 : i32
    return %c0_i32, %arg0 : i32, i32
  }
  func.func @transform_1(%arg0: i32) -> (i32, i32) {
    %c0_i32 = arith.constant 0 : i32
    %c0_i32_0 = arith.constant 0 : i32
    %c0_i32_1 = arith.constant 0 : i32
    return %c0_i32, %c0_i32_0 : i32, i32
  }
  func.func @transform_2(%arg0: i32) -> (i32, i32) {
    %c0_i32 = arith.constant 0 : i32
    %c0_i32_0 = arith.constant 0 : i32
    %c0_i32_1 = arith.constant 0 : i32
    return %c0_i32, %c0_i32_0 : i32, i32
  }
  func.func @transform_3(%arg0: i32) -> (i32, i32) {
    %c0_i32 = arith.constant 0 : i32
    %c0_i32_0 = arith.constant 0 : i32
    %c0_i32_1 = arith.constant 0 : i32
    return %c0_i32, %c0_i32_0 : i32, i32
  }
  func.func @transform_4(%arg0: i32) -> (i32, i32) {
    %c0_i32 = arith.constant 0 : i32
    %c0_i32_0 = arith.constant 0 : i32
    %c0_i32_1 = arith.constant 0 : i32
    return %c0_i32, %c0_i32_0 : i32, i32
  }
  func.func @transform_5(%arg0: i32) -> (i32, i32) {
    %c0_i32 = arith.constant 0 : i32
    %c0_i32_0 = arith.constant 0 : i32
    %c0_i32_1 = arith.constant 0 : i32
    return %c0_i32, %c0_i32_0 : i32, i32
  }
  func.func @transform_6(%arg0: i32) -> (i32, i32) {
    %c0_i32 = arith.constant 0 : i32
    %c0_i32_0 = arith.constant 0 : i32
    %c0_i32_1 = arith.constant 0 : i32
    return %c0_i32, %c0_i32_0 : i32, i32
  }
  func.func @transform_7(%arg0: i32) -> (i32, i32) {
    %c0_i32 = arith.constant 0 : i32
    %c0_i32_0 = arith.constant 0 : i32
    return %c0_i32, %arg0 : i32, i32
  }
}

</mosaic_0001>

<llo_original>
// kernel: tpu_custom_call.1
$region0: #{tpu_custom_call.1}
  #allocation0 [shape = 'u32[]', space=smem, size = 0x4, offset = 0x4, fixed_abs, tag = 'smem constant byte address 0x4 - core index']
  #allocation1 [shape = 'u32[144,128]{1,0:T(1,128)}', space=vmem, size = 0x12000, scoped, tag = 'internal scratch']
  %s0 = inlined_call_operand.vmem [shape: f32[7,128], index: 0, kind: input, shape index: {}]
  %s1 = inlined_call_operand.vmem [shape: f32[32,7], index: 1, kind: input, shape index: {}]
  %s2 = inlined_call_operand.vmem [shape: f32[32,1], index: 2, kind: input, shape index: {}]
  %s3 = inlined_call_operand.vmem [shape: f32[16,32], index: 3, kind: input, shape index: {}]
  %s4 = inlined_call_operand.vmem [shape: f32[16,1], index: 4, kind: input, shape index: {}]
  %s5 = inlined_call_operand.vmem [shape: f32[2,16], index: 5, kind: input, shape index: {}]
  %s6 = inlined_call_operand.vmem [shape: f32[2,1], index: 6, kind: input, shape index: {}]
  %s7 = inlined_call_operand.hbm [shape: f32[2,128], index: 7, kind: output, shape index: {}]
  %s8 = sld [smem:[#allocation0]]
  $region38: #{tpu_custom_call.1} parent=0
    _
  %s10 = ssub.s32 1, %s8
  %s11 = scalar_select 0, %s10, %s8
  $region1: #{tpu_custom_call.1} parent=0
    #allocation2 [shape = 'u8[1024]{0}', space=vmem, size = 0x400, scoped, tag = 'output window, operand 0, single buffered']
    #allocation3 [shape = 's32[1]{0}', space=sflag, size = 0x4, scoped, tag = 'scoped memory for tpu_custom_call.1']
    %12 = vsyncpa [#allocation3], 0
    // Predicated region
    $region2: #{tpu_custom_call.1} parent=1 // pred_check
      _
    $region3: #{tpu_custom_call.1} parent=1 // pred_check_branch
      %14 = sbr.rel (0) target = $region5
    $region4: #{tpu_custom_call.1} parent=1 // pred_region
      _
    $region5: #{tpu_custom_call.1} parent=1 // pred_fallthru
      _
    // Predicated region
    $region6: #{tpu_custom_call.1} parent=1 // pred_check
      _
    $region7: #{tpu_custom_call.1} parent=1 // pred_check_branch
      %16 = sbr.rel (0) target = $region9
    $region8: #{tpu_custom_call.1} parent=1 // pred_region
      _
    $region9: #{tpu_custom_call.1} parent=1 // pred_fallthru
      _
    // Predicated region
    $region10: #{tpu_custom_call.1} parent=1 // pred_check
      _
    $region11: #{tpu_custom_call.1} parent=1 // pred_check_branch
      %18 = sbr.rel (0) target = $region13
    $region12: #{tpu_custom_call.1} parent=1 // pred_region
      _
    $region13: #{tpu_custom_call.1} parent=1 // pred_fallthru
      _
    // Predicated region
    $region14: #{tpu_custom_call.1} parent=1 // pred_check
      _
    $region15: #{tpu_custom_call.1} parent=1 // pred_check_branch
      %20 = sbr.rel (0) target = $region17
    $region16: #{tpu_custom_call.1} parent=1 // pred_region
      _
    $region17: #{tpu_custom_call.1} parent=1 // pred_fallthru
      _
    // Predicated region
    $region18: #{tpu_custom_call.1} parent=1 // pred_check
      _
    $region19: #{tpu_custom_call.1} parent=1 // pred_check_branch
      %22 = sbr.rel (0) target = $region21
    $region20: #{tpu_custom_call.1} parent=1 // pred_region
      _
    $region21: #{tpu_custom_call.1} parent=1 // pred_fallthru
      _
    // Predicated region
    $region22: #{tpu_custom_call.1} parent=1 // pred_check
      _
    $region23: #{tpu_custom_call.1} parent=1 // pred_check_branch
      %24 = sbr.rel (0) target = $region25
    $region24: #{tpu_custom_call.1} parent=1 // pred_region
      _
    $region25: #{tpu_custom_call.1} parent=1 // pred_fallthru
      _
    // Predicated region
    $region26: #{tpu_custom_call.1} parent=1 // pred_check
      _
    $region27: #{tpu_custom_call.1} parent=1 // pred_check_branch
      %26 = sbr.rel (0) target = $region29
    $region28: #{tpu_custom_call.1} parent=1 // pred_region
      _
    $region29: #{tpu_custom_call.1} parent=1 // pred_fallthru
      _
    %v27 = vld [vmem:[%s0] sm:$0x7f]
    %v28 = vld [vmem:[%s1] sm:$0xff]
    %v29 = vld [vmem:[%s1 + $0x8] sm:$0xff]
    %v30 = vld [vmem:[%s1 + $0x10] sm:$0xff]
    %v31 = vld [vmem:[%s1 + $0x18] sm:$0xff]
    %v32 = vld [vmem:[%s2] sm:$0xff]
    %v33 = vld [vmem:[%s2 + $0x8] sm:$0xff]
    %v34 = vld [vmem:[%s2 + $0x10] sm:$0xff]
    %v35 = vld [vmem:[%s2 + $0x18] sm:$0xff]
    %37 = vset.pattern.permute.xlu0 0
    %38 = vperm.xlu0 %37, %v32
    %v39 = vpop.permute.xlu0 %38
    %42 = vset.pattern.permute.xlu0 0
    %43 = vperm.xlu0 %42, %v33
    %v44 = vpop.permute.xlu0 %43
    %47 = vset.pattern.permute.xlu0 0
    %48 = vperm.xlu0 %47, %v34
    %v49 = vpop.permute.xlu0 %48
    %52 = vset.pattern.permute.xlu0 0
    %53 = vperm.xlu0 %52, %v35
    %v54 = vpop.permute.xlu0 %53
    %vm56 = vcmask 56320
    %v58 = vsel %vm56, %v28, 0
    %v61 = vsel %vm56, %v29, 0
    %v64 = vsel %vm56, %v30, 0
    %v67 = vsel %vm56, %v31, 0
    %vm69 = vcmask 1046528
    %v71 = vsel %vm69, %v27, 0
    %73 = vmatprep.subr.mxu0 0.0
    %74 = vmatpush1.msra.mxu0 0.0
    %75 = vmatprep.subr.mxu0 0.0
    %76 = vmatpush1.msra.mxu0 0.0
    %77 = vmatprep.subr.mxu0 0.0
    %78 = vmatpush1.msra.mxu0 0.0
    %79 = vmatprep.subr.mxu0 0.0
    %80 = vmatpush1.msra.mxu0 0.0
    %81 = vmatprep.subr.mxu0 0.0
    %82 = vmatpush1.msra.mxu0 0.0
    %83 = vmatprep.subr.mxu0 0.0
    %84 = vmatpush1.msra.mxu0 0.0
    %85 = vmatprep.subr.mxu0 0.0
    %86 = vmatpush1.msra.mxu0 0.0
    %87 = vmatprep.subr.mxu0 0.0
    %88 = vmatpush1.msra.mxu0 0.0
    %89 = vmatprep.subr.mxu0 0.0
    %90 = vmatpush1.msra.mxu0 0.0
    %91 = vmatprep.subr.mxu0 0.0
    %92 = vmatpush1.msra.mxu0 0.0
    %93 = vmatprep.subr.mxu0 0.0
    %94 = vmatpush1.msra.mxu0 0.0
    %95 = vmatprep.subr.mxu0 0.0
    %96 = vmatpush1.msra.mxu0 0.0
    %97 = vmatprep.subr.mxu0 0.0
    %98 = vmatpush1.msra.mxu0 0.0
    %99 = vmatprep.subr.mxu0 0.0
    %100 = vmatpush1.msra.mxu0 0.0
    %101 = vmatprep.subr.mxu0 0.0
    %102 = vmatpush1.msra.mxu0 0.0
    %103 = vmatprep.subr.mxu0 0.0
    %104 = vmatpush1.msra.mxu0 %v71
    %105 = vmatprep.subr.mxu0 0.0
    %106 = vmatpush2.msra.mxu0 0.0
    %107 = vmatprep.subr.mxu0 0.0
    %108 = vmatpush2.msra.mxu0 0.0
    %109 = vmatprep.subr.mxu0 0.0
    %110 = vmatpush2.msra.mxu0 0.0
    %111 = vmatprep.subr.mxu0 0.0
    %112 = vmatpush2.msra.mxu0 0.0
    %113 = vmatprep.subr.mxu0 0.0
    %114 = vmatpush2.msra.mxu0 0.0
    %115 = vmatprep.subr.mxu0 0.0
    %116 = vmatpush2.msra.mxu0 0.0
    %117 = vmatprep.subr.mxu0 0.0
    %118 = vmatpush2.msra.mxu0 0.0
    %119 = vmatprep.subr.mxu0 0.0
    %120 = vmatpush2.msra.mxu0 0.0
    %121 = vmatprep.subr.mxu0 0.0
    %122 = vmatpush2.msra.mxu0 0.0
    %123 = vmatprep.subr.mxu0 0.0
    %124 = vmatpush2.msra.mxu0 0.0
    %125 = vmatprep.subr.mxu0 0.0
    %126 = vmatpush2.msra.mxu0 0.0
    %127 = vmatprep.subr.mxu0 0.0
    %128 = vmatpush2.msra.mxu0 0.0
    %129 = vmatprep.subr.mxu0 0.0
    %130 = vmatpush2.msra.mxu0 0.0
    %131 = vmatprep.subr.mxu0 0.0
    %132 = vmatpush2.msra.mxu0 0.0
    %133 = vmatprep.subr.mxu0 0.0
    %134 = vmatpush2.msra.mxu0 0.0
    %135 = vmatprep.subr.mxu0 0.0
    %136 = vmatpush2.msra.mxu0 0.0
    %137 = vmatprep.mubr.f32.mxu0 0.0
    %138 = vmatmul.mubr.f32.gmra.mxu0 %v58
    %v139 = vpop.f32.mrf.mxu0
    %v140 = vadd.f32 %v39, %v139
    %v141 = vpop.f32.mrf.mxu0
    %142 = vmatprep.mubr.f32.mxu0 0.0
    %143 = vmatmul.mubr.f32.gmra.mxu0 %v61
    %v144 = vpop.f32.mrf.mxu0
    %v145 = vadd.f32 %v44, %v144
    %v146 = vpop.f32.mrf.mxu0
    %147 = vmatprep.mubr.f32.mxu0 0.0
    %148 = vmatmul.mubr.f32.gmra.mxu0 %v64
    %v149 = vpop.f32.mrf.mxu0
    %v150 = vadd.f32 %v49, %v149
    %v151 = vpop.f32.mrf.mxu0
    %152 = vmatprep.mubr.f32.mxu0 0.0
    %153 = vmatmul.mubr.f32.gmra.mxu0 %v67
    %v154 = vpop.f32.mrf.mxu0
    %v155 = vadd.f32 %v54, %v154
    %v156 = vpop.f32.mrf.mxu0
    %157 = vdwg.mxu0
    %v158 = vmax.f32 %v140, 0.0
    %v159 = vmax.f32 %v145, 0.0
    %v160 = vmax.f32 %v150, 0.0
    %v161 = vmax.f32 %v155, 0.0
    %v162 = vld [vmem:[%s3] sm:$0xff]
    %v163 = vld [vmem:[%s3 + $0x8] sm:$0xff]
    %v164 = vld [vmem:[%s4] sm:$0xff]
    %v165 = vld [vmem:[%s4 + $0x8] sm:$0xff]
    %167 = vset.pattern.permute.xlu0 0
    %168 = vperm.xlu0 %167, %v164
    %v169 = vpop.permute.xlu0 %168
    %172 = vset.pattern.permute.xlu0 0
    %173 = vperm.xlu0 %172, %v165
    %v174 = vpop.permute.xlu0 %173
    %vm176 = vcmask 261120
    %v178 = vsel %vm176, %v162, 0
    %v181 = vsel %vm176, %v163, 0
    %183 = vmatprep.subr.mxu0 0.0
    %184 = vmatpush1.msra.mxu0 0.0
    %185 = vmatprep.subr.mxu0 0.0
    %186 = vmatpush1.msra.mxu0 0.0
    %187 = vmatprep.subr.mxu0 0.0
    %188 = vmatpush1.msra.mxu0 0.0
    %189 = vmatprep.subr.mxu0 0.0
    %190 = vmatpush1.msra.mxu0 0.0
    %191 = vmatprep.subr.mxu0 0.0
    %192 = vmatpush1.msra.mxu0 0.0
    %193 = vmatprep.subr.mxu0 0.0
    %194 = vmatpush1.msra.mxu0 0.0
    %195 = vmatprep.subr.mxu0 0.0
    %196 = vmatpush1.msra.mxu0 0.0
    %197 = vmatprep.subr.mxu0 0.0
    %198 = vmatpush1.msra.mxu0 0.0
    %199 = vmatprep.subr.mxu0 0.0
    %200 = vmatpush1.msra.mxu0 0.0
    %201 = vmatprep.subr.mxu0 0.0
    %202 = vmatpush1.msra.mxu0 0.0
    %203 = vmatprep.subr.mxu0 0.0
    %204 = vmatpush1.msra.mxu0 0.0
    %205 = vmatprep.subr.mxu0 0.0
    %206 = vmatpush1.msra.mxu0 0.0
    %207 = vmatprep.subr.mxu0 0.0
    %208 = vmatpush1.msra.mxu0 %v161
    %209 = vmatprep.subr.mxu0 0.0
    %210 = vmatpush1.msra.mxu0 %v160
    %211 = vmatprep.subr.mxu0 0.0
    %212 = vmatpush1.msra.mxu0 %v159
    %213 = vmatprep.subr.mxu0 0.0
    %214 = vmatpush1.msra.mxu0 %v158
    %215 = vmatprep.subr.mxu0 0.0
    %216 = vmatpush2.msra.mxu0 0.0
    %217 = vmatprep.subr.mxu0 0.0
    %218 = vmatpush2.msra.mxu0 0.0
    %219 = vmatprep.subr.mxu0 0.0
    %220 = vmatpush2.msra.mxu0 0.0
    %221 = vmatprep.subr.mxu0 0.0
    %222 = vmatpush2.msra.mxu0 0.0
    %223 = vmatprep.subr.mxu0 0.0
    %224 = vmatpush2.msra.mxu0 0.0
    %225 = vmatprep.subr.mxu0 0.0
    %226 = vmatpush2.msra.mxu0 0.0
    %227 = vmatprep.subr.mxu0 0.0
    %228 = vmatpush2.msra.mxu0 0.0
    %229 = vmatprep.subr.mxu0 0.0
    %230 = vmatpush2.msra.mxu0 0.0
    %231 = vmatprep.subr.mxu0 0.0
    %232 = vmatpush2.msra.mxu0 0.0
    %233 = vmatprep.subr.mxu0 0.0
    %234 = vmatpush2.msra.mxu0 0.0
    %235 = vmatprep.subr.mxu0 0.0
    %236 = vmatpush2.msra.mxu0 0.0
    %237 = vmatprep.subr.mxu0 0.0
    %238 = vmatpush2.msra.mxu0 0.0
    %239 = vmatprep.subr.mxu0 0.0
    %240 = vmatpush2.msra.mxu0 0.0
    %241 = vmatprep.subr.mxu0 0.0
    %242 = vmatpush2.msra.mxu0 0.0
    %243 = vmatprep.subr.mxu0 0.0
    %244 = vmatpush2.msra.mxu0 0.0
    %245 = vmatprep.subr.mxu0 0.0
    %246 = vmatpush2.msra.mxu0 0.0
    %247 = vmatprep.mubr.f32.mxu0 0.0
    %248 = vmatmul.mubr.f32.gmra.mxu0 %v178
    %v249 = vpop.f32.mrf.mxu0
    %v250 = vadd.f32 %v169, %v249
    %v251 = vpop.f32.mrf.mxu0
    %252 = vmatprep.mubr.f32.mxu0 0.0
    %253 = vmatmul.mubr.f32.gmra.mxu0 %v181
    %v254 = vpop.f32.mrf.mxu0
    %v255 = vadd.f32 %v174, %v254
    %v256 = vpop.f32.mrf.mxu0
    %257 = vdwg.mxu0
    %v258 = vmax.f32 %v250, 0.0
    %v259 = vmax.f32 %v255, 0.0
    %v260 = vld [vmem:[%s5] sm:$0x3]
    %v261 = vld [vmem:[%s6] sm:$0x3]
    %263 = vset.pattern.permute.xlu0 0
    %264 = vperm.xlu0 %263, %v261
    %v265 = vpop.permute.xlu0 %264
    %vm267 = vcmask 130048
    %v269 = vsel %vm267, %v260, 0
    %271 = vmatprep.subr.mxu0 0.0
    %272 = vmatpush1.msra.mxu0 0.0
    %273 = vmatprep.subr.mxu0 0.0
    %274 = vmatpush1.msra.mxu0 0.0
    %275 = vmatprep.subr.mxu0 0.0
    %276 = vmatpush1.msra.mxu0 0.0
    %277 = vmatprep.subr.mxu0 0.0
    %278 = vmatpush1.msra.mxu0 0.0
    %279 = vmatprep.subr.mxu0 0.0
    %280 = vmatpush1.msra.mxu0 0.0
    %281 = vmatprep.subr.mxu0 0.0
    %282 = vmatpush1.msra.mxu0 0.0
    %283 = vmatprep.subr.mxu0 0.0
    %284 = vmatpush1.msra.mxu0 0.0
    %285 = vmatprep.subr.mxu0 0.0
    %286 = vmatpush1.msra.mxu0 0.0
    %287 = vmatprep.subr.mxu0 0.0
    %288 = vmatpush1.msra.mxu0 0.0
    %289 = vmatprep.subr.mxu0 0.0
    %290 = vmatpush1.msra.mxu0 0.0
    %291 = vmatprep.subr.mxu0 0.0
    %292 = vmatpush1.msra.mxu0 0.0
    %293 = vmatprep.subr.mxu0 0.0
    %294 = vmatpush1.msra.mxu0 0.0
    %295 = vmatprep.subr.mxu0 0.0
    %296 = vmatpush1.msra.mxu0 0.0
    %297 = vmatprep.subr.mxu0 0.0
    %298 = vmatpush1.msra.mxu0 0.0
    %299 = vmatprep.subr.mxu0 0.0
    %300 = vmatpush1.msra.mxu0 %v259
    %301 = vmatprep.subr.mxu0 0.0
    %302 = vmatpush1.msra.mxu0 %v258
    %303 = vmatprep.subr.mxu0 0.0
    %304 = vmatpush2.msra.mxu0 0.0
    %305 = vmatprep.subr.mxu0 0.0
    %306 = vmatpush2.msra.mxu0 0.0
    %307 = vmatprep.subr.mxu0 0.0
    %308 = vmatpush2.msra.mxu0 0.0
    %309 = vmatprep.subr.mxu0 0.0
    %310 = vmatpush2.msra.mxu0 0.0
    %311 = vmatprep.subr.mxu0 0.0
    %312 = vmatpush2.msra.mxu0 0.0
    %313 = vmatprep.subr.mxu0 0.0
    %314 = vmatpush2.msra.mxu0 0.0
    %315 = vmatprep.subr.mxu0 0.0
    %316 = vmatpush2.msra.mxu0 0.0
    %317 = vmatprep.subr.mxu0 0.0
    %318 = vmatpush2.msra.mxu0 0.0
    %319 = vmatprep.subr.mxu0 0.0
    %320 = vmatpush2.msra.mxu0 0.0
    %321 = vmatprep.subr.mxu0 0.0
    %322 = vmatpush2.msra.mxu0 0.0
    %323 = vmatprep.subr.mxu0 0.0
    %324 = vmatpush2.msra.mxu0 0.0
    %325 = vmatprep.subr.mxu0 0.0
    %326 = vmatpush2.msra.mxu0 0.0
    %327 = vmatprep.subr.mxu0 0.0
    %328 = vmatpush2.msra.mxu0 0.0
    %329 = vmatprep.subr.mxu0 0.0
    %330 = vmatpush2.msra.mxu0 0.0
    %331 = vmatprep.subr.mxu0 0.0
    %332 = vmatpush2.msra.mxu0 0.0
    %333 = vmatprep.subr.mxu0 0.0
    %334 = vmatpush2.msra.mxu0 0.0
    %335 = vmatprep.mubr.f32.mxu0 0.0
    %336 = vmatmul.mubr.f32.gmra.mxu0 %v269
    %v337 = vpop.f32.mrf.mxu0
    %v338 = vadd.f32 %v265, %v337
    %v339 = vpop.f32.mrf.mxu0
    %340 = vdwg.mxu0
    %v342 = vrot.slane %v338, 7
    %v344 = vsub.f32 %v338, %v342
    %v345 = vmul.f32 %v344, 1.442695
    %v346 = vpow.pop %v345
    %v347 = vadd.f32 %v346, 1.0
    %v348 = vrcp.pop %v347
    %v349 = vmul.f32 1.0, %v348
    %v350 = vsub.f32 1.0, %v349
    %v352 = vrot.slane %v349, 1
    %vm354 = vcmask 1040384
    %v355 = vsel %vm354, %v352, %v350
    %356 = vst [vmem:[#allocation2] sm:$0x3] %v355
    // Predicated region
    $region30: #{tpu_custom_call.1} parent=1 // pred_check
      _
    $region31: #{tpu_custom_call.1} parent=1 // pred_check_branch
      %358 = sbr.rel (0) target = $region33
    $region32: #{tpu_custom_call.1} parent=1 // pred_region
      %s360 = ssub.s32 32, 32
      %361 = vsyncadd [#allocation3], %s360
      %s363 = sshll.u32 [#allocation2], 4
      %s364 = int_to_ptr.vmem [resolvable:$true] %s363
      %366 = dma.vmem_to_hbm [thread:$0]  %s364, 32, %s7, [#allocation3]
    $region33: #{tpu_custom_call.1} parent=1 // pred_fallthru
      _
    // Predicated region
    $region34: #{tpu_custom_call.1} parent=1 // pred_check
      _
    $region35: #{tpu_custom_call.1} parent=1 // pred_check_branch
      %368 = sbr.rel (0) target = $region37
    $region36: #{tpu_custom_call.1} parent=1 // pred_region
      %369 = dma.done [#allocation3], 32
    $region37: #{tpu_custom_call.1} parent=1 // pred_fallthru
      _
    %370 = vsyncpa [#allocation3], 1

</llo_original>
